<compile_context>
chip_gen: v6e
topology: v6e:2x2x1
jax: 0.10.0
libtpu: 0.0.40
codegen_flags: <defaults>
</compile_context>

<pallas_src>
import numpy as np
import jax
import jax.numpy as jnp
from jax.experimental import pallas as pl
from jax.experimental.pallas import tpu as pltpu


def _pool_matrix(size: int, times: int) -> np.ndarray:
    """Compose `times` successive AvgPool1d(2, stride=2) ops into one matrix.

    Returns P of shape (out, size) such that y = P @ x reproduces repeated
    2-pooling exactly (including PyTorch's floor on odd sizes).
    """
    M = np.eye(size, dtype=np.float32)
    cur = size
    for _ in range(times):
        out = cur // 2
        P = np.zeros((out, cur), dtype=np.float32)
        for o in range(out):
            P[o, 2 * o] = 0.5
            P[o, 2 * o + 1] = 0.5
        M = P @ M
        cur = out
    return M  # (final_size, size)


def _round_up(a: int, m: int) -> int:
    return -(-a // m) * m


def _kron_kernel(pt_ref, x_ref, o_ref):
    # pt_ref: (H*W, Ho*Wo)  composed 2-D pooling matrix kron(A, B)^T (VMEM-resident).
    # x_ref : (TB, H*W)     lane-dense flattened planes.
    # o_ref : (TB, Ho*Wo)   lane-dense flattened pooled planes.
    o_ref[...] = jnp.dot(x_ref[...], pt_ref[...],
                         preferred_element_type=jnp.float32).astype(o_ref.dtype)


def _separable_kernel(a_ref, bt_ref, x_ref, o_ref):
    # a_ref : (Ho, H)   f32 pooling matrix for the H axis (VMEM-resident constant).
    # bt_ref: (W, Wo)   pooling matrix for the W axis, transposed (VMEM-resident).
    # x_ref : (TB, H, W)
    # o_ref : (TB, Ho, Wo)
    tb, h, w = x_ref.shape
    wo = bt_ref.shape[1]
    # W-axis pooling: one large 2-D MXU contraction over the whole block,
    # f32 accumulation (no explicit upcast of the input block).
    t = jnp.dot(x_ref[...].reshape(tb * h, w), bt_ref[...],
                preferred_element_type=jnp.float32).reshape(tb, h, wo)
    # H-axis pooling: A stays unbatched -> single contraction stream, no
    # broadcast_to copies of A in VMEM.
    out = jnp.einsum("oh,bhw->bow", a_ref[...], t,
                     preferred_element_type=jnp.float32)
    o_ref[...] = out.astype(o_ref.dtype)


def input_projection_a(x: jax.Array, sampling_times: int) -> jax.Array:
    """Equivalent of InputProjectionA(samplingTimes=sampling_times).forward(x)."""
    N, C, H, W = x.shape
    if sampling_times <= 0:
        return x

    A_np = _pool_matrix(H, sampling_times)        # (Ho, H)
    B_np = _pool_matrix(W, sampling_times)        # (Wo, W)
    Ho, Wo = A_np.shape[0], B_np.shape[0]
    if Ho == 0 or Wo == 0:
        # Degenerate: a spatial dim collapses to zero (H or W < 2**s).
        return jnp.zeros((N, C, Ho, Wo), dtype=x.dtype)

    # Pool weights are exact powers of two -> exact in bf16, so bf16 inputs go
    # to the MXU natively (f32 accumulation via preferred_element_type); no
    # in-kernel upcast pass over the block.
    compute_dtype = x.dtype if x.dtype in (jnp.bfloat16, jnp.float32) else jnp.float32
    itemsize = jnp.dtype(x.dtype).itemsize

    B_total = N * C
    HW, HoWo = H * W, Ho * Wo

    # ---- Generation-aware VMEM budget --------------------------------------
    try:  # v7x: 64 MiB/TC; v5e/v6e: 128 MiB.
        vmem_cap = getattr(pltpu.get_tpu_info(), "vmem_capacity_bytes",
                           64 * 1024 * 1024)
    except Exception:
        vmem_cap = 64 * 1024 * 1024
    vmem_limit = (48 * 1024 * 1024 if vmem_cap <= 64 * 1024 * 1024
                  else 64 * 1024 * 1024)
    # Per-buffer input-block budget; x2 double buffering + f32 temps + output
    # still leave headroom inside vmem_limit.
    block_budget = vmem_limit // 6

    # Small spatial dims -> single kron(A, B) matmul on a lane-dense layout.
    use_kron = HW * HoWo * 4 <= 2 * 1024 * 1024

    if use_kron:
        vmem_plane = _round_up(HW, 128) * itemsize                    # lane-padded
    else:
        vmem_plane = _round_up(H, 8) * _round_up(W, 128) * itemsize   # tile-padded

    tb_budget = max(1, block_budget // vmem_plane)
    # >=4 grid steps when there is enough work: keeps the 2-deep pipeline full
    # and gives both v7x TensorCores blocks on the "parallel" axis.
    n_blocks = max(4, pl.cdiv(B_total, tb_budget))
    tb = pl.cdiv(B_total, n_blocks)
    if use_kron:
        # In the flattened (B, H*W) layout tb is the sublane dim: keep it a
        # multiple of 8, or use a single full-extent block for tiny batches.
        tb = B_total if B_total <= 8 else _round_up(tb, 8)
    tb = min(tb, B_total) if tb > B_total else tb
    n_blocks = pl.cdiv(B_total, tb)
    B_pad = n_blocks * tb

    cost = pl.CostEstimate(
        flops=(2 * B_total * HW * HoWo) if use_kron
        else (2 * B_total * H * W * Wo + 2 * B_total * H * Wo * Ho),
        transcendentals=0,
        bytes_accessed=B_total * HW * itemsize + B_total * HoWo * itemsize,
    )
    cparams = pltpu.CompilerParams(
        dimension_semantics=("parallel",),
        vmem_limit_bytes=vmem_limit,
    )

    if use_kron:
        # (H*W, Ho*Wo) combined pooling matrix; y_flat = x_flat @ kron(A,B)^T.
        Pt = jnp.asarray(np.kron(A_np, B_np).T, dtype=compute_dtype)
        x2d = x.reshape(B_total, HW)                 # free: contiguous in HBM
        if B_pad != B_total:
            x2d = jnp.pad(x2d, ((0, B_pad - B_total), (0, 0)))
        out = pl.pallas_call(
            _kron_kernel,
            out_shape=jax.ShapeDtypeStruct((B_pad, HoWo), x.dtype),
            grid_spec=pltpu.PrefetchScalarGridSpec(
                num_scalar_prefetch=0,
                grid=(n_blocks,),
                in_specs=[
                    # Constant block index -> P^T stays VMEM-resident.
                    pl.BlockSpec((HW, HoWo), lambda i: (0, 0)),
                    pl.BlockSpec((tb, HW), lambda i: (i, 0)),
                ],
                out_specs=pl.BlockSpec((tb, HoWo), lambda i: (i, 0)),
            ),
            compiler_params=cparams,
            cost_estimate=cost,
        )(Pt, x2d)
        # (B, Ho*Wo) is byte-identical to (N, C, Ho, Wo): reshape is free.
        return out[:B_total].reshape(N, C, Ho, Wo)

    # ---- Large-spatial separable path (kron matrix would be too big) -------
    A = jnp.asarray(A_np, dtype=jnp.float32)          # second contraction is on f32 t
    Bt = jnp.asarray(B_np.T, dtype=compute_dtype)     # (W, Wo)
    x3d = x.reshape(B_total, H, W)
    if B_pad != B_total:
        x3d = jnp.pad(x3d, ((0, B_pad - B_total), (0, 0), (0, 0)))
    out = pl.pallas_call(
        _separable_kernel,
        out_shape=jax.ShapeDtypeStruct((B_pad, Ho, Wo), x.dtype),
        grid_spec=pltpu.PrefetchScalarGridSpec(
            num_scalar_prefetch=0,
            grid=(n_blocks,),
            in_specs=[
                pl.BlockSpec((Ho, H), lambda i: (0, 0)),
                pl.BlockSpec((W, Wo), lambda i: (0, 0)),
                pl.BlockSpec((tb, H, W), lambda i: (i, 0, 0)),
            ],
            out_specs=pl.BlockSpec((tb, Ho, Wo), lambda i: (i, 0, 0)),
        ),
        compiler_params=cparams,
        cost_estimate=cost,
    )(A, Bt, x3d)
    return out[:B_total].reshape(N, C, Ho, Wo)


if __name__ == "__main__":
    sampling_times = 2                      # module's samplingTimes
    key = jax.random.PRNGKey(0)
    x = jax.random.normal(key, (2, 4, 16, 16), dtype=jnp.float32)

    y = jax.block_until_ready(input_projection_a(x, sampling_times))

    # Pure-JAX reference: repeated 2x2 average pooling (PyTorch semantics).
    ref = x
    for _ in range(sampling_times):
        n, c, h, w = ref.shape
        ref = ref[:, :, : (h // 2) * 2, : (w // 2) * 2]
        ref = ref.reshape(n, c, h // 2, 2, w // 2, 2).mean(axis=(3, 5))

    assert y.shape == ref.shape == (2, 4, 4, 4)
    assert jnp.allclose(y, ref, atol=1e-5, rtol=1e-5)
    print("KERNEL_OK")
</pallas_src>

<mosaic_0001>
module attributes {stable_mosaic.version = 11 : i64} {
  func.func @_kron_kernel(%arg0: i32, %arg1: memref<256x16xf32, #tpu.memory_space<vmem>>, %arg2: memref<8x256xf32, #tpu.memory_space<vmem>>, %arg3: memref<8x16xf32, #tpu.memory_space<vmem>>) attributes {dimension_semantics = [#tpu.dimension_semantics<parallel>], iteration_bounds = array<i64: 1>, scalar_prefetch = 0 : i64, scratch_operands = 0 : i64, tpu.core_type = #tpu.core_type<tc>, window_params = [{pipeline_mode = #tpu.pipeline_mode<synchronous>, transform_indices = @transform_0, window_bounds = array<i64: 256, 16>}, {transform_indices = @transform_1, window_bounds = array<i64: 8, 256>}, {transform_indices = @transform_2, window_bounds = array<i64: 8, 16>}]} {
    %c0 = arith.constant 0 : index
    %c0_0 = arith.constant 0 : index
    %0 = vector.load %arg2[%c0, %c0_0] : memref<8x256xf32, #tpu.memory_space<vmem>>, vector<8x256xf32>
    %c0_1 = arith.constant 0 : index
    %c0_2 = arith.constant 0 : index
    %1 = vector.load %arg1[%c0_1, %c0_2] : memref<256x16xf32, #tpu.memory_space<vmem>>, vector<256x16xf32>
    %cst = arith.constant dense<0.000000e+00> : vector<8x16xf32>
    %2 = tpu.matmul %0, %1, %cst {dimension_numbers = #tpu.dot_dimension_numbers<[1], [0], [0], [1], [0, 0, 1, 1], [], []>} : vector<8x256xf32>, vector<256x16xf32>, vector<8x16xf32> -> vector<8x16xf32>
    %c0_3 = arith.constant 0 : index
    %c0_4 = arith.constant 0 : index
    %3 = vector.load %arg3[%c0_3, %c0_4] : memref<8x16xf32, #tpu.memory_space<vmem>>, vector<8x16xf32>
    tpu.vector_store %arg3[%c0_3, %c0_4], %2 {strides = array<i32>} : memref<8x16xf32, #tpu.memory_space<vmem>>, vector<8x16xf32>,
    return
  }
  func.func @transform_0(%arg0: i32) -> (i32, i32) {
    %c0_i32 = arith.constant 0 : i32
    %c0_i32_0 = arith.constant 0 : i32
    %c0_i32_1 = arith.constant 0 : i32
    return %c0_i32, %c0_i32_0 : i32, i32
  }
  func.func @transform_1(%arg0: i32) -> (i32, i32) {
    %c0_i32 = arith.constant 0 : i32
    %c0_i32_0 = arith.constant 0 : i32
    return %arg0, %c0_i32 : i32, i32
  }
  func.func @transform_2(%arg0: i32) -> (i32, i32) {
    %c0_i32 = arith.constant 0 : i32
    %c0_i32_0 = arith.constant 0 : i32
    return %arg0, %c0_i32 : i32, i32
  }
}

</mosaic_0001>

<llo_original>
// kernel: tpu_custom_call.1
$region0: #{tpu_custom_call.1}
  #allocation0 [shape = 'u32[]', space=smem, size = 0x4, offset = 0x4, fixed_abs, tag = 'smem constant byte address 0x4 - core index']
  #allocation1 [shape = 'u32[144,128]{1,0:T(1,128)}', space=vmem, size = 0x12000, scoped, tag = 'internal scratch']
  %s0 = inlined_call_operand.vmem [shape: f32[256,16], index: 0, kind: input, shape index: {}]
  %s1 = inlined_call_operand.vmem [shape: f32[8,256], index: 1, kind: input, shape index: {}]
  %s2 = inlined_call_operand.hbm [shape: f32[8,16], index: 2, kind: output, shape index: {}]
  %s3 = sld [smem:[#allocation0]]
  $region18: #{tpu_custom_call.1} parent=0
    _
  %s5 = ssub.s32 1, %s3
  %s6 = scalar_select 0, %s5, %s3
  $region1: #{tpu_custom_call.1} parent=0
    #allocation2 [shape = 'u8[4096]{0}', space=vmem, size = 0x1000, scoped, tag = 'output window, operand 0, single buffered']
    #allocation3 [shape = 's32[1]{0}', space=sflag, size = 0x4, scoped, tag = 'scoped memory for tpu_custom_call.1']
    %7 = vsyncpa [#allocation3], 0
    // Predicated region
    $region2: #{tpu_custom_call.1} parent=1 // pred_check
      _
    $region3: #{tpu_custom_call.1} parent=1 // pred_check_branch
      %9 = sbr.rel (0) target = $region5
    $region4: #{tpu_custom_call.1} parent=1 // pred_region
      _
    $region5: #{tpu_custom_call.1} parent=1 // pred_fallthru
      _
    // Predicated region
    $region6: #{tpu_custom_call.1} parent=1 // pred_check
      _
    $region7: #{tpu_custom_call.1} parent=1 // pred_check_branch
      %11 = sbr.rel (0) target = $region9
    $region8: #{tpu_custom_call.1} parent=1 // pred_region
      _
    $region9: #{tpu_custom_call.1} parent=1 // pred_fallthru
      _
    %v12 = vld [vmem:[%s1] sm:$0xff]
    %v13 = vld [vmem:[%s1 + $0x8] sm:$0xff]
    %v14 = vld [vmem:[%s0] sm:$0xff]
    %v15 = vld [vmem:[%s0 + $0x8] sm:$0xff]
    %v16 = vld [vmem:[%s0 + $0x10] sm:$0xff]
    %v17 = vld [vmem:[%s0 + $0x18] sm:$0xff]
    %v18 = vld [vmem:[%s0 + $0x20] sm:$0xff]
    %v19 = vld [vmem:[%s0 + $0x28] sm:$0xff]
    %v20 = vld [vmem:[%s0 + $0x30] sm:$0xff]
    %v21 = vld [vmem:[%s0 + $0x38] sm:$0xff]
    %v22 = vld [vmem:[%s0 + $0x40] sm:$0xff]
    %v23 = vld [vmem:[%s0 + $0x48] sm:$0xff]
    %v24 = vld [vmem:[%s0 + $0x50] sm:$0xff]
    %v25 = vld [vmem:[%s0 + $0x58] sm:$0xff]
    %v26 = vld [vmem:[%s0 + $0x60] sm:$0xff]
    %v27 = vld [vmem:[%s0 + $0x68] sm:$0xff]
    %v28 = vld [vmem:[%s0 + $0x70] sm:$0xff]
    %v29 = vld [vmem:[%s0 + $0x78] sm:$0xff]
    %v30 = vld [vmem:[%s0 + $0x80] sm:$0xff]
    %v31 = vld [vmem:[%s0 + $0x88] sm:$0xff]
    %v32 = vld [vmem:[%s0 + $0x90] sm:$0xff]
    %v33 = vld [vmem:[%s0 + $0x98] sm:$0xff]
    %v34 = vld [vmem:[%s0 + $0xa0] sm:$0xff]
    %v35 = vld [vmem:[%s0 + $0xa8] sm:$0xff]
    %v36 = vld [vmem:[%s0 + $0xb0] sm:$0xff]
    %v37 = vld [vmem:[%s0 + $0xb8] sm:$0xff]
    %v38 = vld [vmem:[%s0 + $0xc0] sm:$0xff]
    %v39 = vld [vmem:[%s0 + $0xc8] sm:$0xff]
    %v40 = vld [vmem:[%s0 + $0xd0] sm:$0xff]
    %v41 = vld [vmem:[%s0 + $0xd8] sm:$0xff]
    %v42 = vld [vmem:[%s0 + $0xe0] sm:$0xff]
    %v43 = vld [vmem:[%s0 + $0xe8] sm:$0xff]
    %v44 = vld [vmem:[%s0 + $0xf0] sm:$0xff]
    %v45 = vld [vmem:[%s0 + $0xf8] sm:$0xff]
    %46 = vmatprep.subr.mxu0 0.0
    %47 = vmatpush1.msra.mxu0 %v29
    %48 = vmatprep.subr.mxu0 0.0
    %49 = vmatpush1.msra.mxu0 %v28
    %50 = vmatprep.subr.mxu0 0.0
    %51 = vmatpush1.msra.mxu0 %v27
    %52 = vmatprep.subr.mxu0 0.0
    %53 = vmatpush1.msra.mxu0 %v26
    %54 = vmatprep.subr.mxu0 0.0
    %55 = vmatpush1.msra.mxu0 %v25
    %56 = vmatprep.subr.mxu0 0.0
    %57 = vmatpush1.msra.mxu0 %v24
    %58 = vmatprep.subr.mxu0 0.0
    %59 = vmatpush1.msra.mxu0 %v23
    %60 = vmatprep.subr.mxu0 0.0
    %61 = vmatpush1.msra.mxu0 %v22
    %62 = vmatprep.subr.mxu0 0.0
    %63 = vmatpush1.msra.mxu0 %v21
    %64 = vmatprep.subr.mxu0 0.0
    %65 = vmatpush1.msra.mxu0 %v20
    %66 = vmatprep.subr.mxu0 0.0
    %67 = vmatpush1.msra.mxu0 %v19
    %68 = vmatprep.subr.mxu0 0.0
    %69 = vmatpush1.msra.mxu0 %v18
    %70 = vmatprep.subr.mxu0 0.0
    %71 = vmatpush1.msra.mxu0 %v17
    %72 = vmatprep.subr.mxu0 0.0
    %73 = vmatpush1.msra.mxu0 %v16
    %74 = vmatprep.subr.mxu0 0.0
    %75 = vmatpush1.msra.mxu0 %v15
    %76 = vmatprep.subr.mxu0 0.0
    %77 = vmatpush1.msra.mxu0 %v14
    %78 = vmatprep.subr.mxu0 0.0
    %79 = vmatpush2.msra.mxu0 %v45
    %80 = vmatprep.subr.mxu0 0.0
    %81 = vmatpush2.msra.mxu0 %v44
    %82 = vmatprep.subr.mxu0 0.0
    %83 = vmatpush2.msra.mxu0 %v43
    %84 = vmatprep.subr.mxu0 0.0
    %85 = vmatpush2.msra.mxu0 %v42
    %86 = vmatprep.subr.mxu0 0.0
    %87 = vmatpush2.msra.mxu0 %v41
    %88 = vmatprep.subr.mxu0 0.0
    %89 = vmatpush2.msra.mxu0 %v40
    %90 = vmatprep.subr.mxu0 0.0
    %91 = vmatpush2.msra.mxu0 %v39
    %92 = vmatprep.subr.mxu0 0.0
    %93 = vmatpush2.msra.mxu0 %v38
    %94 = vmatprep.subr.mxu0 0.0
    %95 = vmatpush2.msra.mxu0 %v37
    %96 = vmatprep.subr.mxu0 0.0
    %97 = vmatpush2.msra.mxu0 %v36
    %98 = vmatprep.subr.mxu0 0.0
    %99 = vmatpush2.msra.mxu0 %v35
    %100 = vmatprep.subr.mxu0 0.0
    %101 = vmatpush2.msra.mxu0 %v34
    %102 = vmatprep.subr.mxu0 0.0
    %103 = vmatpush2.msra.mxu0 %v33
    %104 = vmatprep.subr.mxu0 0.0
    %105 = vmatpush2.msra.mxu0 %v32
    %106 = vmatprep.subr.mxu0 0.0
    %107 = vmatpush2.msra.mxu0 %v31
    %108 = vmatprep.subr.mxu0 0.0
    %109 = vmatpush2.msra.mxu0 %v30
    %110 = vmatprep.mubr.f32.mxu0 %v13
    %111 = vmatmul.mubr.f32.gmra.mxu0 %v12
    %v112 = vpop.f32.mrf.mxu0
    %v113 = vadd.f32 0.0, %v112
    %v114 = vpop.f32.mrf.mxu0
    %115 = vdwg.mxu0
    %vm116 = vcmask 130048
    %117 = vst.msk [vmem:[#allocation2] sm:$0xff] %vm116, %v113
    // Predicated region
    $region10: #{tpu_custom_call.1} parent=1 // pred_check
      _
    $region11: #{tpu_custom_call.1} parent=1 // pred_check_branch
      %119 = sbr.rel (0) target = $region13
    $region12: #{tpu_custom_call.1} parent=1 // pred_region
      %s121 = ssub.s32 128, 128
      %122 = vsyncadd [#allocation3], %s121
      %s124 = sshll.u32 [#allocation2], 4
      %s125 = int_to_ptr.vmem [resolvable:$true] %s124
      %127 = dma.vmem_to_hbm [thread:$0]  %s125, 128, %s2, [#allocation3]
    $region13: #{tpu_custom_call.1} parent=1 // pred_fallthru
      _
    // Predicated region
    $region14: #{tpu_custom_call.1} parent=1 // pred_check
      _
    $region15: #{tpu_custom_call.1} parent=1 // pred_check_branch
      %129 = sbr.rel (0) target = $region17
    $region16: #{tpu_custom_call.1} parent=1 // pred_region
      %130 = dma.done [#allocation3], 128
    $region17: #{tpu_custom_call.1} parent=1 // pred_fallthru
      _
    %131 = vsyncpa [#allocation3], 1

</llo_original>
